<compile_context>
chip_gen: v6e
topology: v6e:2x2x1
jax: 0.10.0
libtpu: 0.0.40
codegen_flags: <defaults>
</compile_context>

<pallas_src>
import functools

import jax
import jax.numpy as jnp
from jax.experimental import pallas as pl
from jax.experimental.pallas import tpu as pltpu


def _bg_pool_kernel(mask_ref, out_ref, *, h2, w2, scale):
    """Block-mean pool one strip of the mask via two MXU matmuls.

    mask_ref: (tile_h * h2, W) f32  -- native-layout strip of the mask param
    out_ref : (tile_h, w_pad)  f32  -- pooled (+ *0.1) output rows, lane-padded
    """
    rows, W = mask_ref.shape          # rows = tile_h * h2
    tile_h, w_pad = out_ref.shape

    # a_h[i, r] = 1.0  iff local mask row r lies in output row i's window.
    i_idx = jax.lax.broadcasted_iota(jnp.int32, (tile_h, rows), 0)
    r_idx = jax.lax.broadcasted_iota(jnp.int32, (tile_h, rows), 1)
    lo_h = i_idx * h2
    a_h = ((r_idx >= lo_h) & (r_idx < lo_h + h2)).astype(jnp.float32)

    # a_w[c, j] = scale iff mask column c lies in output column j's window.
    # Padding columns j >= w have empty windows -> exactly zero.
    c_idx = jax.lax.broadcasted_iota(jnp.int32, (W, w_pad), 0)
    j_idx = jax.lax.broadcasted_iota(jnp.int32, (W, w_pad), 1)
    lo_w = j_idx * w2
    a_w = ((c_idx >= lo_w) & (c_idx < lo_w + w2)).astype(jnp.float32) * scale

    tmp = jnp.dot(a_h, mask_ref[...], preferred_element_type=jnp.float32)   # (tile_h, W)
    out_ref[...] = jnp.dot(tmp, a_w, preferred_element_type=jnp.float32)    # (tile_h, w_pad)


def _pick_tile_h(h, h2, W, w_pad, min_tiles, budget_bytes=2 << 20):
    """Largest tile_h that divides h, keeps the (8,128) block constraint legal,
    fits a per-block VMEM byte budget, and yields at least `min_tiles` steps."""
    bytes_per_out_row = (h2 * W + w_pad) * 4

    def aligned(d):
        return d == h or (d * h2) % 8 == 0

    for d in range(h, 0, -1):
        if h % d:
            continue
        if not aligned(d):
            continue
        if h // d < min_tiles:
            continue
        if d * bytes_per_out_row <= budget_bytes:
            return d
    # Nothing satisfies every constraint (tiny h or very wide strips): drop the
    # budget / min-tile requirements and take the smallest aligned divisor.
    for d in range(1, h + 1):
        if h % d == 0 and aligned(d):
            return d
    return h


def background_enhancer_forward(mask, x, batch_size):
    """mask: (1, 1, H, W) f32 parameter; x: (N, C, h, w) -- only spatial dims used."""
    _, _, H, W = mask.shape
    h, w = int(x.shape[2]), int(x.shape[3])
    assert H % h == 0 and W % w == 0, "pool factors must divide mask size"
    h2, w2 = H // h, W // w
    scale = 0.1 / float(h2 * w2)      # fold mean divisor and the 0.1 together

    # Lane-dense output: pad output columns up to a multiple of 128 so the
    # kernel issues unmasked stores; slice back in the wrapper.
    w_pad = ((w + 127) // 128) * 128

    # Force >= 2 row tiles when there is real work so the "parallel" grid axis
    # can shard across v7x's two TensorCores.
    min_tiles = 2 if (h * w >= 256 and h >= 2) else 1
    tile_h = _pick_tile_h(h, h2, W, w_pad, min_tiles)
    grid = (h // tile_h,)

    block_bytes = tile_h * (h2 * W + w_pad) * 4
    vmem_limit = int(min(64 << 20, max(32 << 20, 6 * block_bytes)))

    pooled = pl.pallas_call(
        functools.partial(_bg_pool_kernel, h2=h2, w2=w2, scale=scale),
        out_shape=jax.ShapeDtypeStruct((h, w_pad), jnp.float32),
        grid_spec=pltpu.PrefetchScalarGridSpec(
            num_scalar_prefetch=0,
            grid=grid,
            # Native (1,1,H,W) layout: leading unit dims squeezed by the
            # BlockSpec, no wrapper transpose / extra HBM round trip.
            in_specs=[pl.BlockSpec((None, None, tile_h * h2, W),
                                   lambda i: (0, 0, i, 0))],
            out_specs=pl.BlockSpec((tile_h, w_pad), lambda i: (i, 0)),
        ),
        compiler_params=pltpu.CompilerParams(
            dimension_semantics=("parallel",),
            vmem_limit_bytes=vmem_limit),
    )(mask.astype(jnp.float32))

    if w_pad != w:
        pooled = pooled[:, :w]

    # Batch `repeat` + NCHW reshape: free layout plumbing in XLA.
    return jnp.broadcast_to(pooled.reshape(1, 1, h, w), (batch_size, 1, h, w))


def _reference_forward(mask, x, batch_size):
    """Pure-JAX reference mirroring the PyTorch einops forward."""
    h, w = int(x.shape[2]), int(x.shape[3])
    _, _, H, W = mask.shape
    h2, w2 = H // h, W // w
    pooled = mask.reshape(1, 1, h, h2, w, w2).mean(axis=(3, 5))     # (1,1,h,w)
    return jnp.broadcast_to(pooled, (batch_size, 1, h, w)) * 0.1


# TODO(synk): `register_buffer('init', zeros(1).long())` / `get_init()` is
# stateful bookkeeping unused by forward(); no kernel equivalent needed.

if __name__ == "__main__":
    key = jax.random.PRNGKey(0)

    # Module config: input_size=(32, 32), batch_size=2.
    input_size = (32, 32)
    batch_size = 2

    # Parameter init exactly as in __init__: ones * 10.
    mask = jnp.ones((1, 1, *input_size), dtype=jnp.float32) * 10.0

    # Example forward input (only its spatial dims matter): (2, 4, 16, 16).
    x = jax.random.normal(key, (batch_size, 4, 16, 16), dtype=jnp.float32)

    out = jax.block_until_ready(background_enhancer_forward(mask, x, batch_size))
    ref = _reference_forward(mask, x, batch_size)
    assert out.shape == (batch_size, 1, 16, 16), out.shape
    assert out.dtype == jnp.float32, out.dtype
    assert jnp.allclose(out, ref, atol=1e-6, rtol=1e-6), "mismatch vs reference"

    # Non-constant mask: exercises the block-mean pooling path.
    mask2 = mask + jax.random.normal(jax.random.PRNGKey(1), mask.shape,
                                     dtype=jnp.float32)
    out2 = jax.block_until_ready(background_enhancer_forward(mask2, x, batch_size))
    ref2 = _reference_forward(mask2, x, batch_size)
    assert jnp.allclose(out2, ref2, atol=1e-5, rtol=1e-5), "mismatch (perturbed)"

    # Different pooling factor (input 8x8 -> 4x4 windows): exercises the
    # single-tile / full-block path.
    x3 = jax.random.normal(jax.random.PRNGKey(2), (batch_size, 4, 8, 8),
                           dtype=jnp.float32)
    out3 = jax.block_until_ready(background_enhancer_forward(mask2, x3, batch_size))
    ref3 = _reference_forward(mask2, x3, batch_size)
    assert out3.shape == (batch_size, 1, 8, 8), out3.shape
    assert jnp.allclose(out3, ref3, atol=1e-5, rtol=1e-5), "mismatch (8x8)"

    print("KERNEL_OK")
</pallas_src>

<mosaic_0001>
module attributes {stable_mosaic.version = 11 : i64} {
  func.func @_bg_pool_kernel(%arg0: i32, %arg1: memref<1x1x16x32xf32, #tpu.memory_space<vmem>>, %arg2: memref<8x128xf32, #tpu.memory_space<vmem>>) attributes {dimension_semantics = [#tpu.dimension_semantics<parallel>], iteration_bounds = array<i64: 2>, scalar_prefetch = 0 : i64, scratch_operands = 0 : i64, tpu.core_type = #tpu.core_type<tc>, window_params = [{transform_indices = @transform_0, window_bounds = array<i64: 1, 1, 16, 32>}, {transform_indices = @transform_1, window_bounds = array<i64: 8, 128>}]} {
    %0 = tpu.iota {dimensions = array<i32: 0>} : vector<8x16xi32>
    %1 = tpu.iota {dimensions = array<i32: 1>} : vector<8x16xi32>
    %c2_i32 = arith.constant 2 : i32
    %2 = vector.broadcast %c2_i32 : i32 to vector<8x16xi32>
    %3 = arith.muli %0, %2 : vector<8x16xi32>
    %4 = arith.cmpi sge, %1, %3 : vector<8x16xi32>
    %c2_i32_0 = arith.constant 2 : i32
    %5 = vector.broadcast %c2_i32_0 : i32 to vector<8x16xi32>
    %6 = arith.addi %3, %5 : vector<8x16xi32>
    %7 = arith.cmpi slt, %1, %6 : vector<8x16xi32>
    %8 = arith.andi %4, %7 : vector<8x16xi1>
    %9 = arith.extui %8 : vector<8x16xi1> to vector<8x16xi32>
    %10 = arith.sitofp %9 : vector<8x16xi32> to vector<8x16xf32>
    %11 = tpu.iota {dimensions = array<i32: 0>} : vector<32x128xi32>
    %12 = tpu.iota {dimensions = array<i32: 1>} : vector<32x128xi32>
    %c2_i32_1 = arith.constant 2 : i32
    %13 = vector.broadcast %c2_i32_1 : i32 to vector<32x128xi32>
    %14 = arith.muli %12, %13 : vector<32x128xi32>
    %15 = arith.cmpi sge, %11, %14 : vector<32x128xi32>
    %c2_i32_2 = arith.constant 2 : i32
    %16 = vector.broadcast %c2_i32_2 : i32 to vector<32x128xi32>
    %17 = arith.addi %14, %16 : vector<32x128xi32>
    %18 = arith.cmpi slt, %11, %17 : vector<32x128xi32>
    %19 = arith.andi %15, %18 : vector<32x128xi1>
    %20 = arith.extui %19 : vector<32x128xi1> to vector<32x128xi32>
    %21 = arith.sitofp %20 : vector<32x128xi32> to vector<32x128xf32>
    %cst = arith.constant 2.500000e-02 : f32
    %22 = vector.broadcast %cst : f32 to vector<32x128xf32>
    %23 = arith.mulf %21, %22 : vector<32x128xf32>
    %c0 = arith.constant 0 : index
    %c0_3 = arith.constant 0 : index
    %c0_4 = arith.constant 0 : index
    %c0_5 = arith.constant 0 : index
    %24 = vector.load %arg1[%c0, %c0_3, %c0_4, %c0_5] : memref<1x1x16x32xf32, #tpu.memory_space<vmem>>, vector<1x1x16x32xf32>
    %25 = vector.shape_cast %24 : vector<1x1x16x32xf32> to vector<16x32xf32>
    %cst_6 = arith.constant dense<0.000000e+00> : vector<8x32xf32>
    %26 = tpu.matmul %10, %25, %cst_6 {dimension_numbers = #tpu.dot_dimension_numbers<[1], [0], [0], [1], [0, 0, 1, 1], [], []>} : vector<8x16xf32>, vector<16x32xf32>, vector<8x32xf32> -> vector<8x32xf32>
    %cst_7 = arith.constant dense<0.000000e+00> : vector<8x128xf32>
    %27 = tpu.matmul %26, %23, %cst_7 {dimension_numbers = #tpu.dot_dimension_numbers<[1], [0], [0], [1], [0, 0, 1, 1], [], []>} : vector<8x32xf32>, vector<32x128xf32>, vector<8x128xf32> -> vector<8x128xf32>
    %c0_8 = arith.constant 0 : index
    %c0_9 = arith.constant 0 : index
    %28 = vector.load %arg2[%c0_8, %c0_9] : memref<8x128xf32, #tpu.memory_space<vmem>>, vector<8x128xf32>
    tpu.vector_store %arg2[%c0_8, %c0_9], %27 {strides = array<i32>} : memref<8x128xf32, #tpu.memory_space<vmem>>, vector<8x128xf32>,
    return
  }
  func.func @transform_0(%arg0: i32) -> (i32, i32, i32, i32) {
    %c0_i32 = arith.constant 0 : i32
    %c0_i32_0 = arith.constant 0 : i32
    %c0_i32_1 = arith.constant 0 : i32
    %c0_i32_2 = arith.constant 0 : i32
    return %c0_i32, %c0_i32_0, %arg0, %c0_i32_1 : i32, i32, i32, i32
  }
  func.func @transform_1(%arg0: i32) -> (i32, i32) {
    %c0_i32 = arith.constant 0 : i32
    %c0_i32_0 = arith.constant 0 : i32
    return %arg0, %c0_i32 : i32, i32
  }
}

</mosaic_0001>

<llo_original>
// kernel: tpu_custom_call.1
$region0: #{tpu_custom_call.1}
  #allocation0 [shape = 'u32[]', space=smem, size = 0x4, offset = 0x4, fixed_abs, tag = 'smem constant byte address 0x4 - core index']
  #allocation1 [shape = 'u32[144,128]{1,0:T(1,128)}', space=vmem, size = 0x12000, scoped, tag = 'internal scratch']
  %s0 = inlined_call_operand.hbm [shape: f32[1,1,32,32], index: 0, kind: input, shape index: {}]
  %s1 = inlined_call_operand.hbm [shape: f32[16,128], index: 1, kind: output, shape index: {}]
  %s2 = sld [smem:[#allocation0]]
  $region41: #{tpu_custom_call.1} parent=0
    _
  %s4 = ssub.s32 1, %s2
  %s5 = scalar_select 0, %s4, %s2
  $region1: #{tpu_custom_call.1} parent=0
    #allocation2 [shape = 'u8[16384]{0}', space=vmem, size = 0x4000, scoped, tag = 'input window, operand 0']
    #allocation3 [shape = 's32[2]{0}', space=sflag, size = 0x8, scoped, tag = 'scoped memory for tpu_custom_call.1']
    #allocation4 [shape = 's32[2]{0}', space=sflag, size = 0x8, scoped, tag = 'scoped memory for tpu_custom_call.1']
    #allocation5 [shape = 'u8[8192]{0}', space=vmem, size = 0x2000, scoped, tag = 'output window, operand 0']
    %6 = vsyncpa [#allocation3], 0
    %s7 = scalar_lea.sflag [#allocation3], 1
    %8 = vsyncpa %s7, 0
    %9 = vsyncpa [#allocation4], 0
    %s10 = scalar_lea.sflag [#allocation4], 1
    %11 = vsyncpa %s10, 0
    loop: start=0, step=1, limit=4
    $region2: #{tpu_custom_call.1} parent=1 // loop_pre_header
      _
    $region3: #{tpu_custom_call.1} parent=1 // loop_header
      %s13 = sphi 0, %s17
      %p14 = scmp.ge.s32.totalorder %s13, 4
      %s23 = sphi 0, %s25
      %s26 = sphi 0, %s23
      %s27 = sphi 0, %s26
      %s43 = sphi 0, %s27
      %s49 = sphi 0, %s51
      %s52 = sphi 0, %s49
      %s53 = sphi 0, %s52
      %s69 = sphi 0, %s53
    $region4: #{tpu_custom_call.1} parent=1 // loop_header_branch
      %16 = sbr.rel (%p14) target = $region8
    $region5: #{tpu_custom_call.1} parent=1 // loop_body
      %s18 = ssub.s32 %s13, 1
      %s19 = ssub.s32 %s13, 2
      %s20 = sadd.s32 %s13, 1
      %s21 = ssub.s32 %s13, %s20
      %p22 = scmp.eq.s32.totalorder %s21, 0
      %s24 = sadd.s32 %s23, 1
      %s25 = scalar_select %p22, %s23, %s24
      %p28 = pneg %p22
      %p29 = scmp.eq.s32.totalorder %s13, 1
      %p30 = por %p28, %p29
      %p31 = scmp.ne.s32.totalorder %s23, %s26
      %p32 = scmp.eq.s32.totalorder %s13, 0
      %p33 = por %p31, %p32
      %p34 = scmp.ne.s32.totalorder %s23, %s26
      %p35 = scmp.eq.s32.totalorder %s18, 1
      %p36 = por %p34, %p35
      %p37 = scmp.ne.s32.totalorder %s26, %s27
      %p38 = scmp.eq.s32.totalorder %s18, 0
      %p39 = por %p37, %p38
      %p40 = scmp.ne.s32.totalorder %s26, %s27
      %p41 = scmp.eq.s32.totalorder %s19, 1
      %p42 = por %p40, %p41
      %p44 = scmp.ne.s32.totalorder %s27, %s43
      %p45 = scmp.eq.s32.totalorder %s19, 0
      %p46 = por %p44, %p45
      %s47 = ssub.s32 %s13, %s20
      %p48 = scmp.eq.s32.totalorder %s47, 0
      %s50 = sadd.s32 %s49, 1
      %s51 = scalar_select %p48, %s49, %s50
      %p54 = pneg %p48
      %p55 = scmp.eq.s32.totalorder %s13, 1
      %p56 = por %p54, %p55
      %p57 = scmp.ne.s32.totalorder %s49, %s52
      %p58 = scmp.eq.s32.totalorder %s13, 0
      %p59 = por %p57, %p58
      %p60 = scmp.ne.s32.totalorder %s49, %s52
      %p61 = scmp.eq.s32.totalorder %s18, 1
      %p62 = por %p60, %p61
      %p63 = scmp.ne.s32.totalorder %s52, %s53
      %p64 = scmp.eq.s32.totalorder %s18, 0
      %p65 = por %p63, %p64
      %p66 = scmp.ne.s32.totalorder %s52, %s53
      %p67 = scmp.eq.s32.totalorder %s19, 1
      %p68 = por %p66, %p67
      %p70 = scmp.ne.s32.totalorder %s53, %s69
      %p71 = scmp.eq.s32.totalorder %s19, 0
      %p72 = por %p70, %p71
      %p73 = scmp.le.s32.totalorder 1, %s13
      %p74 = scmp.lt.s32.totalorder %s13, 3
      %p75 = pnand %p73, %p74
      %p76 = pneg %p75
      // Predicated region
      $region9: #{tpu_custom_call.1} parent=5 // pred_check
        _
      $region10: #{tpu_custom_call.1} parent=5 // pred_check_branch
        %78 = sbr.rel (%p75) target = $region12
      $region11: #{tpu_custom_call.1} parent=5 // pred_region
        %s79 = ssub.s32 %s13, 1
      $region12: #{tpu_custom_call.1} parent=5 // pred_fallthru
        _
      %p80 = scmp.lt.s32.totalorder %s13, 2
      // Predicated region
      $region13: #{tpu_custom_call.1} parent=5 // pred_check
        %p81 = pneg %p80
      $region14: #{tpu_custom_call.1} parent=5 // pred_check_branch
        %83 = sbr.rel (%p81) target = $region16
      $region15: #{tpu_custom_call.1} parent=5 // pred_region
        // Predicated region
        $region17: #{tpu_custom_call.1} parent=15 // pred_check
          %p84 = pneg %p33
        $region18: #{tpu_custom_call.1} parent=15 // pred_check_branch
          %86 = sbr.rel (%p84) target = $region20
        $region19: #{tpu_custom_call.1} parent=15 // pred_region
          %s87 = sand.u32 %s23, 1
          %s88 = scalar_lea.sflag [#allocation3], %s87
          %s89 = sand.u32 %s23, 1
          %s90 = smul.addr %s89, 16
          %s91 = scalar_lea.vmem [#allocation2], %s90
          %s92 = smul.u32 2, %s13
          %s94 = ssub.s32 256, 256
          %95 = vsyncadd %s88, %s94
          %s96 = smul.addr %s92, 128
          %s97 = scalar_lea.hbm %s0, %s96
          %s98 = sshll.u32 %s91, 4
          %s99 = int_to_ptr.vmem [resolvable:$true] %s98
          %104 = dma.hbm_to_vmem [thread:$0]  %s97, 256, %s99, %s88, 128, 128, 8
        $region20: #{tpu_custom_call.1} parent=15 // pred_fallthru
          _
      $region16: #{tpu_custom_call.1} parent=5 // pred_fallthru
        _
      %p105 = scmp.le.s32.totalorder 1, %s13
      %p106 = scmp.lt.s32.totalorder %s13, 3
      %p107 = pnand %p105, %p106
      %p108 = pneg %p107
      // Predicated region
      $region21: #{tpu_custom_call.1} parent=5 // pred_check
        _
      $region22: #{tpu_custom_call.1} parent=5 // pred_check_branch
        %110 = sbr.rel (%p107) target = $region24
      $region23: #{tpu_custom_call.1} parent=5 // pred_region
        %s111 = ssub.s32 %s13, 1
        %s112 = sand.u32 %s26, 1
        %s113 = scalar_lea.sflag [#allocation3], %s112
        %s114 = sand.u32 %s26, 1
        %s115 = smul.addr %s114, 16
        %s116 = scalar_lea.vmem [#allocation2], %s115
        // Predicated region
        $region25: #{tpu_custom_call.1} parent=23 // pred_check
          %p117 = pneg %p39
        $region26: #{tpu_custom_call.1} parent=23 // pred_check_branch
          %119 = sbr.rel (%p117) target = $region28
        $region27: #{tpu_custom_call.1} parent=23 // pred_region
          %120 = dma.done %s113, 256
        $region28: #{tpu_custom_call.1} parent=23 // pred_fallthru
          _
        %s121 = sand.u32 %s26, 1
        %s122 = scalar_lea.sflag [#allocation3], %s121
        %s123 = sand.u32 %s26, 1
        %s124 = smul.addr %s123, 16
        %s125 = scalar_lea.vmem [#allocation2], %s124
        %p126 = pneg %p39
        %p127 = pneg %p36
        %p128 = pneg %p65
        %p129 = pneg %p62
        %s130 = sand.u32 %s52, 1
        %s131 = scalar_lea.sflag [#allocation4], %s130
        %s132 = sand.u32 %s52, 1
        %s133 = smul.addr %s132, 8
        %s134 = scalar_lea.vmem [#allocation5], %s133
        %s135 = smul.u32 2, %s18
        %v136 = vlaneseq
        %v137 = vshrl.u32 %v136, 7
        %v138 = vlaneseq
        %v139 = vand.u32 %v138, 127
        %v140 = vmul.u32 %v137, 2
        %vm141 = vcmp.ge.s32.totalorder %v139, %v140
        %v142 = vadd.s32 %v140, 2
        %vm143 = vcmp.lt.s32.totalorder %v139, %v142
        %vm144 = vmand %vm141, %vm143
        %v145 = vsel %vm144, 1, 0
        %v146 = vcvt.s32.f32 %v145
        %v147 = vadd.s32 %v137, 8
        %v148 = vadd.s32 %v137, 16
        %v149 = vadd.s32 %v137, 24
        %v150 = vmul.u32 %v139, 2
        %vm151 = vcmp.ge.s32.totalorder %v137, %v150
        %vm152 = vcmp.ge.s32.totalorder %v147, %v150
        %vm153 = vcmp.ge.s32.totalorder %v148, %v150
        %vm154 = vcmp.ge.s32.totalorder %v149, %v150
        %v155 = vadd.s32 %v150, 2
        %vm156 = vcmp.lt.s32.totalorder %v137, %v155
        %vm157 = vcmp.lt.s32.totalorder %v147, %v155
        %vm158 = vcmp.lt.s32.totalorder %v148, %v155
        %vm159 = vcmp.lt.s32.totalorder %v149, %v155
        %vm160 = vmand %vm151, %vm156
        %vm161 = vmand %vm152, %vm157
        %vm162 = vmand %vm153, %vm158
        %vm163 = vmand %vm154, %vm159
        %v164 = vsel %vm160, 1, 0
        %v165 = vsel %vm161, 1, 0
        %v166 = vsel %vm162, 1, 0
        %v167 = vsel %vm163, 1, 0
        %v168 = vcvt.s32.f32 %v164
        %v169 = vcvt.s32.f32 %v165
        %v170 = vcvt.s32.f32 %v166
        %v171 = vcvt.s32.f32 %v167
        %v172 = vmul.f32 %v168, 0.025
        %v173 = vmul.f32 %v169, 0.025
        %v174 = vmul.f32 %v170, 0.025
        %v175 = vmul.f32 %v171, 0.025
        %v176 = vld [vmem:[%s116] sm:$0xff]
        %v177 = vld [vmem:[%s116 + $0x8] sm:$0xff]
        %vm178 = vcmask 130048
        %v180 = vsel %vm178, %v146, 0
        %182 = vmatprep.subr.mxu0 0.0
        %183 = vmatpush1.msra.mxu0 0.0
        %184 = vmatprep.subr.mxu0 0.0
        %185 = vmatpush1.msra.mxu0 0.0
        %186 = vmatprep.subr.mxu0 0.0
        %187 = vmatpush1.msra.mxu0 0.0
        %188 = vmatprep.subr.mxu0 0.0
        %189 = vmatpush1.msra.mxu0 0.0
        %190 = vmatprep.subr.mxu0 0.0
        %191 = vmatpush1.msra.mxu0 0.0
        %192 = vmatprep.subr.mxu0 0.0
        %193 = vmatpush1.msra.mxu0 0.0
        %194 = vmatprep.subr.mxu0 0.0
        %195 = vmatpush1.msra.mxu0 0.0
        %196 = vmatprep.subr.mxu0 0.0
        %197 = vmatpush1.msra.mxu0 0.0
        %198 = vmatprep.subr.mxu0 0.0
        %199 = vmatpush1.msra.mxu0 0.0
        %200 = vmatprep.subr.mxu0 0.0
        %201 = vmatpush1.msra.mxu0 0.0
        %202 = vmatprep.subr.mxu0 0.0
        %203 = vmatpush1.msra.mxu0 0.0
        %204 = vmatprep.subr.mxu0 0.0
        %205 = vmatpush1.msra.mxu0 0.0
        %206 = vmatprep.subr.mxu0 0.0
        %207 = vmatpush1.msra.mxu0 0.0
        %208 = vmatprep.subr.mxu0 0.0
        %209 = vmatpush1.msra.mxu0 0.0
        %210 = vmatprep.subr.mxu0 0.0
        %211 = vmatpush1.msra.mxu0 %v177
        %212 = vmatprep.subr.mxu0 0.0
        %213 = vmatpush1.msra.mxu0 %v176
        %214 = vmatprep.subr.mxu0 0.0
        %215 = vmatpush2.msra.mxu0 0.0
        %216 = vmatprep.subr.mxu0 0.0
        %217 = vmatpush2.msra.mxu0 0.0
        %218 = vmatprep.subr.mxu0 0.0
        %219 = vmatpush2.msra.mxu0 0.0
        %220 = vmatprep.subr.mxu0 0.0
        %221 = vmatpush2.msra.mxu0 0.0
        %222 = vmatprep.subr.mxu0 0.0
        %223 = vmatpush2.msra.mxu0 0.0
        %224 = vmatprep.subr.mxu0 0.0
        %225 = vmatpush2.msra.mxu0 0.0
        %226 = vmatprep.subr.mxu0 0.0
        %227 = vmatpush2.msra.mxu0 0.0
        %228 = vmatprep.subr.mxu0 0.0
        %229 = vmatpush2.msra.mxu0 0.0
        %230 = vmatprep.subr.mxu0 0.0
        %231 = vmatpush2.msra.mxu0 0.0
        %232 = vmatprep.subr.mxu0 0.0
        %233 = vmatpush2.msra.mxu0 0.0
        %234 = vmatprep.subr.mxu0 0.0
        %235 = vmatpush2.msra.mxu0 0.0
        %236 = vmatprep.subr.mxu0 0.0
        %237 = vmatpush2.msra.mxu0 0.0
        %238 = vmatprep.subr.mxu0 0.0
        %239 = vmatpush2.msra.mxu0 0.0
        %240 = vmatprep.subr.mxu0 0.0
        %241 = vmatpush2.msra.mxu0 0.0
        %242 = vmatprep.subr.mxu0 0.0
        %243 = vmatpush2.msra.mxu0 0.0
        %244 = vmatprep.subr.mxu0 0.0
        %245 = vmatpush2.msra.mxu0 0.0
        %246 = vmatprep.mubr.f32.mxu0 0.0
        %247 = vmatmul.mubr.f32.gmra.mxu0 %v180
        %v248 = vpop.f32.mrf.mxu0
        %v249 = vadd.f32 0.0, %v248
        %v250 = vpop.f32.mrf.mxu0
        %251 = vdwg.mxu0
        %vm252 = vcmask 261120
        %v254 = vsel %vm252, %v249, 0
        %256 = vmatprep.subr.mxu0 0.0
        %257 = vmatpush1.msra.mxu0 0.0
        %258 = vmatprep.subr.mxu0 0.0
        %259 = vmatpush1.msra.mxu0 0.0
        %260 = vmatprep.subr.mxu0 0.0
        %261 = vmatpush1.msra.mxu0 0.0
        %262 = vmatprep.subr.mxu0 0.0
        %263 = vmatpush1.msra.mxu0 0.0
        %264 = vmatprep.subr.mxu0 0.0
        %265 = vmatpush1.msra.mxu0 0.0
        %266 = vmatprep.subr.mxu0 0.0
        %267 = vmatpush1.msra.mxu0 0.0
        %268 = vmatprep.subr.mxu0 0.0
        %269 = vmatpush1.msra.mxu0 0.0
        %270 = vmatprep.subr.mxu0 0.0
        %271 = vmatpush1.msra.mxu0 0.0
        %272 = vmatprep.subr.mxu0 0.0
        %273 = vmatpush1.msra.mxu0 0.0
        %274 = vmatprep.subr.mxu0 0.0
        %275 = vmatpush1.msra.mxu0 0.0
        %276 = vmatprep.subr.mxu0 0.0
        %277 = vmatpush1.msra.mxu0 0.0
        %278 = vmatprep.subr.mxu0 0.0
        %279 = vmatpush1.msra.mxu0 0.0
        %280 = vmatprep.subr.mxu0 0.0
        %281 = vmatpush1.msra.mxu0 %v175
        %282 = vmatprep.subr.mxu0 0.0
        %283 = vmatpush1.msra.mxu0 %v174
        %284 = vmatprep.subr.mxu0 0.0
        %285 = vmatpush1.msra.mxu0 %v173
        %286 = vmatprep.subr.mxu0 0.0
        %287 = vmatpush1.msra.mxu0 %v172
        %288 = vmatprep.subr.mxu0 0.0
        %289 = vmatpush2.msra.mxu0 0.0
        %290 = vmatprep.subr.mxu0 0.0
        %291 = vmatpush2.msra.mxu0 0.0
        %292 = vmatprep.subr.mxu0 0.0
        %293 = vmatpush2.msra.mxu0 0.0
        %294 = vmatprep.subr.mxu0 0.0
        %295 = vmatpush2.msra.mxu0 0.0
        %296 = vmatprep.subr.mxu0 0.0
        %297 = vmatpush2.msra.mxu0 0.0
        %298 = vmatprep.subr.mxu0 0.0
        %299 = vmatpush2.msra.mxu0 0.0
        %300 = vmatprep.subr.mxu0 0.0
        %301 = vmatpush2.msra.mxu0 0.0
        %302 = vmatprep.subr.mxu0 0.0
        %303 = vmatpush2.msra.mxu0 0.0
        %304 = vmatprep.subr.mxu0 0.0
        %305 = vmatpush2.msra.mxu0 0.0
        %306 = vmatprep.subr.mxu0 0.0
        %307 = vmatpush2.msra.mxu0 0.0
        %308 = vmatprep.subr.mxu0 0.0
        %309 = vmatpush2.msra.mxu0 0.0
        %310 = vmatprep.subr.mxu0 0.0
        %311 = vmatpush2.msra.mxu0 0.0
        %312 = vmatprep.subr.mxu0 0.0
        %313 = vmatpush2.msra.mxu0 0.0
        %314 = vmatprep.subr.mxu0 0.0
        %315 = vmatpush2.msra.mxu0 0.0
        %316 = vmatprep.subr.mxu0 0.0
        %317 = vmatpush2.msra.mxu0 0.0
        %318 = vmatprep.subr.mxu0 0.0
        %319 = vmatpush2.msra.mxu0 0.0
        %320 = vmatprep.mubr.f32.mxu0 0.0
        %321 = vmatmul.mubr.f32.gmra.mxu0 %v254
        %v322 = vpop.f32.mrf.mxu0
        %v323 = vadd.f32 0.0, %v322
        %v324 = vpop.f32.mrf.mxu0
        %325 = vdwg.mxu0
        %326 = vst [vmem:[%s134] sm:$0xff] %v323
        %s327 = sand.u32 %s52, 1
        %s328 = scalar_lea.sflag [#allocation4], %s327
        %s329 = sand.u32 %s52, 1
        %s330 = smul.addr %s329, 8
        %s331 = scalar_lea.vmem [#allocation5], %s330
        // Predicated region
        $region29: #{tpu_custom_call.1} parent=23 // pred_check
          %p332 = pneg %p62
        $region30: #{tpu_custom_call.1} parent=23 // pred_check_branch
          %334 = sbr.rel (%p332) target = $region32
        $region31: #{tpu_custom_call.1} parent=23 // pred_region
          %s336 = ssub.s32 128, 128
          %337 = vsyncadd %s328, %s336
          %s338 = smul.addr %s18, 128
          %s339 = scalar_lea.hbm %s1, %s338
          %s341 = sshll.u32 %s331, 4
          %s342 = int_to_ptr.vmem [resolvable:$true] %s341
          %344 = dma.vmem_to_hbm [thread:$0]  %s342, 128, %s339, %s328
        $region32: #{tpu_custom_call.1} parent=23 // pred_fallthru
          _
      $region24: #{tpu_custom_call.1} parent=5 // pred_fallthru
        _
      %p345 = scmp.le.s32.totalorder 2, %s13
      // Predicated region
      $region33: #{tpu_custom_call.1} parent=5 // pred_check
        %p346 = pneg %p345
      $region34: #{tpu_custom_call.1} parent=5 // pred_check_branch
        %348 = sbr.rel (%p346) target = $region36
      $region35: #{tpu_custom_call.1} parent=5 // pred_region
        %s349 = ssub.s32 %s13, 2
        // Predicated region
        $region37: #{tpu_custom_call.1} parent=35 // pred_check
          %p350 = pneg %p68
        $region38: #{tpu_custom_call.1} parent=35 // pred_check_branch
          %352 = sbr.rel (%p350) target = $region40
        $region39: #{tpu_custom_call.1} parent=35 // pred_region
          %s353 = sand.u32 %s53, 1
          %s354 = scalar_lea.sflag [#allocation4], %s353
          %s355 = sand.u32 %s53, 1
          %s356 = smul.addr %s355, 8
          %s357 = scalar_lea.vmem [#allocation5], %s356
          %358 = dma.done %s354, 128
        $region40: #{tpu_custom_call.1} parent=35 // pred_fallthru
          _
      $region36: #{tpu_custom_call.1} parent=5 // pred_fallthru
        _
    $region6: #{tpu_custom_call.1} parent=1 // loop_footer
      %s17 = sadd.s32 1, %s13
    $region7: #{tpu_custom_call.1} parent=1 // loop_footer_branch
      %12 = sbr.rel target = $region3
    $region8: #{tpu_custom_call.1} parent=1 // loop_exit
      _
    %359 = vsyncpa [#allocation3], 1
    %s360 = scalar_lea.sflag [#allocation3], 1
    %361 = vsyncpa %s360, 1
    %362 = vsyncpa [#allocation4], 1
    %s363 = scalar_lea.sflag [#allocation4], 1
    %364 = vsyncpa %s363, 1

</llo_original>
